<compile_context>
chip_gen: v5e
topology: v5e:2x2
jax: 0.10.0
libtpu: 0.0.40
codegen_flags: <defaults>
</compile_context>

<pallas_src>
import functools

import jax
import jax.numpy as jnp
from jax import lax
from jax.experimental import pallas as pl
from jax.experimental.pallas import tpu as pltpu


def _class_attention_kernel(x_ref, wq_ref, wkv_ref, wproj_ref, bproj_ref,
                            sel_ref, o_ref, *, bb, n_tokens, embed, heads):
    N, E, H = n_tokens, embed, heads

    # Grid-invariant operands (loaded once per grid step; no inner loop left).
    wq = wq_ref[...]          # (E, E)   bf16, attention scale folded in
    wkv = wkv_ref[...]        # (E, 2E)  bf16
    wproj = wproj_ref[...]    # (E, E)   bf16
    bias = bproj_ref[...]     # (1, E)   f32
    sel = sel_ref[...]        # (H, E)   bf16 0/1 head-selection matrix (exact)

    x = x_ref[...]                                # (bb, N, E) bf16
    x_flat = x.reshape(bb * N, E)                 # (bb*N, E)

    # k, v for ALL tokens of the whole batch block in ONE MXU call.
    kv = jnp.dot(x_flat, wkv, preferred_element_type=jnp.float32)   # (bb*N, 2E)
    k = kv[:, :E].reshape(bb, N, E)               # f32
    v = kv[:, E:]                                 # (bb*N, E) f32

    # q only for the class tokens (row 0 of every batch element), batched.
    x_cls = x[:, 0, :]                            # (bb, E) bf16
    q = jnp.dot(x_cls, wq, preferred_element_type=jnp.float32)      # (bb, E)

    # Per-head class-token logits via the 0/1 head-selection matrix:
    #   attn[b, n, h] = sum_e q[b, e] * k[b, n, e] * sel[h, e]
    qk = (q[:, None, :] * k).reshape(bb * N, E)                     # f32
    attn = lax.dot_general(
        qk.astype(jnp.bfloat16), sel,
        dimension_numbers=(((1,), (1,)), ((), ())),                 # contract E
        preferred_element_type=jnp.float32,
    ).reshape(bb, N, H)                                             # (bb, N, H)

    # Softmax over the token axis per (batch, head).  attn_drop / proj_drop
    # are identity at their default 0.0 rates (inference).
    attn = attn - jnp.max(attn, axis=1, keepdims=True)
    p = jnp.exp(attn)
    p = p * pl.reciprocal(jnp.sum(p, axis=1, keepdims=True), approx=True)

    # cls[b, e] = sum_n p[b, n, e // D] * v[b, n, e]
    p_full = jnp.dot(p.reshape(bb * N, H).astype(jnp.bfloat16), sel,
                     preferred_element_type=jnp.float32)            # (bb*N, E)
    cls = jnp.sum((p_full * v).reshape(bb, N, E), axis=1)           # (bb, E)

    # Output projection (+ bias) for all bb class tokens in ONE MXU call.
    out = jnp.dot(cls.astype(jnp.bfloat16), wproj,
                  preferred_element_type=jnp.float32) + bias        # (bb, E)
    o_ref[...] = out.astype(o_ref.dtype)                            # dense store


def _const_spec(shape):
    """BlockSpec for a grid-invariant operand: single-buffered."""
    index_map = lambda i: (0,) * len(shape)
    try:
        return pl.BlockSpec(shape, index_map, pipeline_mode=pl.Buffered(1))
    except (AttributeError, TypeError):
        # Older JAX without pipeline_mode / Buffered: fall back to default.
        return pl.BlockSpec(shape, index_map)


def _pick_batch_block(batch, n_tokens, embed, heads,
                      vmem_budget_bytes=24 * 1024 * 1024):
    """Pick how many batch elements one grid step handles.

    Constraints:
      * bb divides batch,
      * bb % 8 == 0 or bb == batch  (keeps the dense (bb, E) output block
        legal under the (8, 128) tiling rule),
      * the per-step working set fits a conservative VMEM budget
        (double-buffered bf16 x block + f32 temporaries + weights),
      * prefer >= 2 grid steps so a 2-TensorCore chip (v7x) can shard the
        'parallel' axis; single-TC v5e/v6e pay only ~0.35us for the extra step.
    """
    # Resident constants (single-buffered weights in bf16 + sel + bias),
    # counted x2 as a safety margin in case Buffered(1) is unavailable.
    const_bytes = 2 * (4 * embed * embed * 2 + heads * embed * 2 + embed * 4)
    # Per batch element: bf16 x block (double-buffered) ~4*N*E, f32
    # temporaries (kv 8NE + qk 4NE + p_full 4NE + weighted 4NE) ~20*N*E,
    # plus the double-buffered f32 output row.
    per_elem = n_tokens * embed * 24 + embed * 8
    budget = max(vmem_budget_bytes - const_bytes, per_elem)

    def fits(bb):
        return bb * per_elem <= budget

    candidates = [bb for bb in range(8, batch, 8)
                  if batch % bb == 0 and fits(bb)]
    two_step = [bb for bb in candidates if batch // bb >= 2]
    if two_step:
        return max(two_step)
    if candidates:
        return max(candidates)
    return batch   # single grid step; bb == batch keeps the output block legal


def class_attention(x, w_qkv, w_proj, b_proj, num_heads, qk_scale=None):
    """Pallas ClassAttention forward.

    Args:
      x: (B, N, E) float32; token 0 is the class token.
      w_qkv: (3E, E) PyTorch-layout qkv Linear weight (qkv_bias=False).
      w_proj: (E, E) PyTorch-layout proj Linear weight.
      b_proj: (E,) proj Linear bias.
      num_heads: H, with E % H == 0.
      qk_scale: optional override of the attention scale.
    Returns:
      (B, N, E) float32.
    """
    B, N, E = x.shape
    H = num_heads
    assert E % H == 0, "in_features must be divisible by num_heads"
    D = E // H
    scale = float(qk_scale) if qk_scale is not None else float(D) ** -0.5

    # Head-selection matrix: sel[h, e] = 1 iff e // D == h (exact in bf16).
    sel = (jnp.arange(E)[None, :] // D ==
           jnp.arange(H)[:, None]).astype(jnp.bfloat16)

    w_qkv = jnp.asarray(w_qkv, jnp.float32)
    # Split fused qkv weight; fold the attention scale into Wq; bf16 for MXU.
    wq_t = (w_qkv[0:E, :] * scale).T.astype(jnp.bfloat16)              # (E, E)
    wkv_t = w_qkv[E:3 * E, :].T.astype(jnp.bfloat16)                   # (E, 2E)
    wproj_t = jnp.asarray(w_proj, jnp.float32).T.astype(jnp.bfloat16)  # (E, E)
    bproj = jnp.asarray(b_proj, jnp.float32).reshape(1, E)

    x_f32 = jnp.asarray(x, jnp.float32)
    x_bf16 = x_f32.astype(jnp.bfloat16)   # halve the dominant HBM input stream

    bb = _pick_batch_block(B, N, E, H)
    grid = (B // bb,)

    kernel = functools.partial(_class_attention_kernel,
                               bb=bb, n_tokens=N, embed=E, heads=H)

    cls_tok = pl.pallas_call(
        kernel,
        out_shape=jax.ShapeDtypeStruct((B, E), jnp.float32),
        grid_spec=pltpu.PrefetchScalarGridSpec(
            num_scalar_prefetch=0,
            grid=grid,
            in_specs=[
                pl.BlockSpec((bb, N, E), lambda i: (i, 0, 0)),   # x (bf16)
                _const_spec((E, E)),                             # Wq^T * scale
                _const_spec((E, 2 * E)),                         # Wkv^T
                _const_spec((E, E)),                             # Wproj^T
                _const_spec((1, E)),                             # proj bias
                _const_spec((H, E)),                             # head selection
            ],
            out_specs=pl.BlockSpec((bb, E), lambda i: (i, 0)),   # dense 2-D
        ),
        compiler_params=pltpu.CompilerParams(
            dimension_semantics=("parallel",),
            vmem_limit_bytes=32 * 1024 * 1024),
    )(x_bf16, wq_t, wkv_t, wproj_t, bproj, sel)

    # Rows 1: pass through untouched (exact f32 copy of the input).
    return jnp.concatenate([cls_tok[:, None, :], x_f32[:, 1:, :]], axis=1)


def class_attention_ref(x, w_qkv, w_proj, b_proj, num_heads):
    """Pure-JAX f32 reference mirroring the PyTorch module."""
    B, N, E = x.shape
    H = num_heads
    D = E // H
    scale = float(D) ** -0.5
    qkv = x @ w_qkv.T                                   # (B, N, 3E)
    qkv = qkv.reshape(B, N, 3, H, D).transpose(2, 0, 3, 1, 4)
    q, k, v = qkv[0], qkv[1], qkv[2]                    # (B, H, N, D)
    qc = q[:, :, 0:1]                                   # (B, H, 1, D)
    attn_cls = (qc * k).sum(-1) * scale                 # (B, H, N)
    attn_cls = jax.nn.softmax(attn_cls, axis=-1)
    cls_tkn = jnp.einsum('bhn,bhnd->bhd', attn_cls, v).reshape(B, 1, E)
    cls_tkn = cls_tkn @ w_proj.T + b_proj
    return jnp.concatenate([cls_tkn, x[:, 1:]], axis=1)


if __name__ == "__main__":
    B, N, E, H = 2, 8, 128, 8

    key = jax.random.PRNGKey(0)
    kx, kqkv, kproj, kb = jax.random.split(key, 4)
    x = jax.random.normal(kx, (B, N, E), jnp.float32)
    w_qkv = jax.random.normal(kqkv, (3 * E, E), jnp.float32) * 0.02
    w_proj = jax.random.normal(kproj, (E, E), jnp.float32) * 0.02
    b_proj = jax.random.normal(kb, (E,), jnp.float32) * 0.02

    out = class_attention(x, w_qkv, w_proj, b_proj, H)
    out = jax.block_until_ready(out)

    ref = class_attention_ref(x, w_qkv, w_proj, b_proj, H)
    assert out.shape == (B, N, E)
    # bf16 matmul operands + approx reciprocal -> loosened tolerance vs f32 ref.
    assert jnp.allclose(out, ref, atol=2e-2, rtol=2e-2), "mismatch vs reference"

    print("KERNEL_OK")
</pallas_src>

<mosaic_0001>
module attributes {stable_mosaic.version = 11 : i64} {
  func.func @_class_attention_kernel(%arg0: i32, %arg1: memref<2x8x128xbf16, #tpu.memory_space<vmem>>, %arg2: memref<128x128xbf16, #tpu.memory_space<vmem>>, %arg3: memref<128x256xbf16, #tpu.memory_space<vmem>>, %arg4: memref<128x128xbf16, #tpu.memory_space<vmem>>, %arg5: memref<1x128xf32, #tpu.memory_space<vmem>>, %arg6: memref<8x128xbf16, #tpu.memory_space<vmem>>, %arg7: memref<2x128xf32, #tpu.memory_space<vmem>>) attributes {dimension_semantics = [#tpu.dimension_semantics<parallel>], iteration_bounds = array<i64: 1>, scalar_prefetch = 0 : i64, scratch_operands = 0 : i64, tpu.core_type = #tpu.core_type<tc>, window_params = [{transform_indices = @transform_0, window_bounds = array<i64: 2, 8, 128>}, {pipeline_mode = #tpu.pipeline_mode<synchronous>, transform_indices = @transform_1, window_bounds = array<i64: 128, 128>}, {pipeline_mode = #tpu.pipeline_mode<synchronous>, transform_indices = @transform_2, window_bounds = array<i64: 128, 256>}, {pipeline_mode = #tpu.pipeline_mode<synchronous>, transform_indices = @transform_3, window_bounds = array<i64: 128, 128>}, {pipeline_mode = #tpu.pipeline_mode<synchronous>, transform_indices = @transform_4, window_bounds = array<i64: 1, 128>}, {pipeline_mode = #tpu.pipeline_mode<synchronous>, transform_indices = @transform_5, window_bounds = array<i64: 8, 128>}, {transform_indices = @transform_6, window_bounds = array<i64: 2, 128>}]} {
    %c0 = arith.constant 0 : index
    %c0_0 = arith.constant 0 : index
    %0 = vector.load %arg2[%c0, %c0_0] : memref<128x128xbf16, #tpu.memory_space<vmem>>, vector<128x128xbf16>
    %c0_1 = arith.constant 0 : index
    %c0_2 = arith.constant 0 : index
    %1 = vector.load %arg3[%c0_1, %c0_2] : memref<128x256xbf16, #tpu.memory_space<vmem>>, vector<128x256xbf16>
    %c0_3 = arith.constant 0 : index
    %c0_4 = arith.constant 0 : index
    %2 = vector.load %arg4[%c0_3, %c0_4] : memref<128x128xbf16, #tpu.memory_space<vmem>>, vector<128x128xbf16>
    %c0_5 = arith.constant 0 : index
    %c0_6 = arith.constant 0 : index
    %3 = vector.load %arg5[%c0_5, %c0_6] : memref<1x128xf32, #tpu.memory_space<vmem>>, vector<1x128xf32>
    %c0_7 = arith.constant 0 : index
    %c0_8 = arith.constant 0 : index
    %4 = vector.load %arg6[%c0_7, %c0_8] : memref<8x128xbf16, #tpu.memory_space<vmem>>, vector<8x128xbf16>
    %c0_9 = arith.constant 0 : index
    %c0_10 = arith.constant 0 : index
    %c0_11 = arith.constant 0 : index
    %5 = vector.load %arg1[%c0_9, %c0_10, %c0_11] : memref<2x8x128xbf16, #tpu.memory_space<vmem>>, vector<2x8x128xbf16>
    %6 = vector.shape_cast %5 : vector<2x8x128xbf16> to vector<16x128xbf16>
    %cst = arith.constant dense<0.000000e+00> : vector<16x256xf32>
    %7 = tpu.matmul %6, %1, %cst {dimension_numbers = #tpu.dot_dimension_numbers<[1], [0], [0], [1], [0, 0, 1, 1], [], []>} : vector<16x128xbf16>, vector<128x256xbf16>, vector<16x256xf32> -> vector<16x256xf32>
    %8 = vector.extract_strided_slice %7 {offsets = [0, 0], sizes = [16, 128], strides = [1, 1]} : vector<16x256xf32> to vector<16x128xf32>
    %9 = vector.shape_cast %8 : vector<16x128xf32> to vector<2x8x128xf32>
    %10 = vector.extract_strided_slice %7 {offsets = [0, 128], sizes = [16, 128], strides = [1, 1]} : vector<16x256xf32> to vector<16x128xf32>
    %11 = vector.extract_strided_slice %5 {offsets = [0, 0, 0], sizes = [2, 1, 128], strides = [1, 1, 1]} : vector<2x8x128xbf16> to vector<2x1x128xbf16>
    %12 = vector.shape_cast %11 : vector<2x1x128xbf16> to vector<2x128xbf16>
    %cst_12 = arith.constant dense<0.000000e+00> : vector<2x128xf32>
    %13 = tpu.matmul %12, %0, %cst_12 {dimension_numbers = #tpu.dot_dimension_numbers<[1], [0], [0], [1], [0, 0, 1, 1], [], []>} : vector<2x128xbf16>, vector<128x128xbf16>, vector<2x128xf32> -> vector<2x128xf32>
    %14 = vector.shape_cast %13 : vector<2x128xf32> to vector<2x1x128xf32>
    %15 = vector.broadcast %14 : vector<2x1x128xf32> to vector<2x8x128xf32>
    %16 = arith.mulf %15, %9 : vector<2x8x128xf32>
    %17 = vector.shape_cast %16 : vector<2x8x128xf32> to vector<16x128xf32>
    %18 = arith.truncf %17 : vector<16x128xf32> to vector<16x128xbf16>
    %cst_13 = arith.constant dense<0.000000e+00> : vector<16x8xf32>
    %19 = tpu.matmul %18, %4, %cst_13 {dimension_numbers = #tpu.dot_dimension_numbers<[1], [1], [0], [0], [0, 0, 1, 0], [], []>} : vector<16x128xbf16>, vector<8x128xbf16>, vector<16x8xf32> -> vector<16x8xf32>
    %20 = vector.shape_cast %19 : vector<16x8xf32> to vector<2x8x8xf32>
    %cst_14 = arith.constant dense<0xFF800000> : vector<2x8xf32>
    %21 = vector.multi_reduction <maximumf>, %20, %cst_14 [1] : vector<2x8x8xf32> to vector<2x8xf32>
    %22 = vector.shape_cast %21 : vector<2x8xf32> to vector<2x1x8xf32>
    %23 = vector.broadcast %22 : vector<2x1x8xf32> to vector<2x8x8xf32>
    %24 = arith.subf %20, %23 : vector<2x8x8xf32>
    %25 = math.exp %24 : vector<2x8x8xf32>
    %cst_15 = arith.constant dense<0.000000e+00> : vector<2x8xf32>
    %26 = vector.multi_reduction <add>, %25, %cst_15 [1] : vector<2x8x8xf32> to vector<2x8xf32>
    %27 = vector.shape_cast %26 : vector<2x8xf32> to vector<2x1x8xf32>
    %28 = tpu.reciprocal %27 {approx = true} : vector<2x1x8xf32> -> vector<2x1x8xf32>
    %29 = vector.broadcast %28 : vector<2x1x8xf32> to vector<2x8x8xf32>
    %30 = arith.mulf %25, %29 : vector<2x8x8xf32>
    %31 = vector.shape_cast %30 : vector<2x8x8xf32> to vector<16x8xf32>
    %32 = arith.truncf %31 : vector<16x8xf32> to vector<16x8xbf16>
    %cst_16 = arith.constant dense<0.000000e+00> : vector<16x128xf32>
    %33 = tpu.matmul %32, %4, %cst_16 {dimension_numbers = #tpu.dot_dimension_numbers<[1], [0], [0], [1], [0, 0, 1, 1], [], []>} : vector<16x8xbf16>, vector<8x128xbf16>, vector<16x128xf32> -> vector<16x128xf32>
    %34 = arith.mulf %33, %10 : vector<16x128xf32>
    %35 = vector.shape_cast %34 : vector<16x128xf32> to vector<2x8x128xf32>
    %cst_17 = arith.constant dense<0.000000e+00> : vector<2x128xf32>
    %36 = vector.multi_reduction <add>, %35, %cst_17 [1] : vector<2x8x128xf32> to vector<2x128xf32>
    %37 = arith.truncf %36 : vector<2x128xf32> to vector<2x128xbf16>
    %cst_18 = arith.constant dense<0.000000e+00> : vector<2x128xf32>
    %38 = tpu.matmul %37, %2, %cst_18 {dimension_numbers = #tpu.dot_dimension_numbers<[1], [0], [0], [1], [0, 0, 1, 1], [], []>} : vector<2x128xbf16>, vector<128x128xbf16>, vector<2x128xf32> -> vector<2x128xf32>
    %39 = vector.broadcast %3 : vector<1x128xf32> to vector<2x128xf32>
    %40 = arith.addf %38, %39 : vector<2x128xf32>
    %c0_19 = arith.constant 0 : index
    %c0_20 = arith.constant 0 : index
    %41 = vector.load %arg7[%c0_19, %c0_20] : memref<2x128xf32, #tpu.memory_space<vmem>>, vector<2x128xf32>
    tpu.vector_store %arg7[%c0_19, %c0_20], %40 {strides = array<i32>} : memref<2x128xf32, #tpu.memory_space<vmem>>, vector<2x128xf32>,
    return
  }
  func.func @transform_0(%arg0: i32) -> (i32, i32, i32) {
    %c0_i32 = arith.constant 0 : i32
    %c0_i32_0 = arith.constant 0 : i32
    %c0_i32_1 = arith.constant 0 : i32
    return %arg0, %c0_i32, %c0_i32_0 : i32, i32, i32
  }
  func.func @transform_1(%arg0: i32) -> (i32, i32) {
    %c0_i32 = arith.constant 0 : i32
    %c0_i32_0 = arith.constant 0 : i32
    %c0_i32_1 = arith.constant 0 : i32
    return %c0_i32, %c0_i32_0 : i32, i32
  }
  func.func @transform_2(%arg0: i32) -> (i32, i32) {
    %c0_i32 = arith.constant 0 : i32
    %c0_i32_0 = arith.constant 0 : i32
    %c0_i32_1 = arith.constant 0 : i32
    return %c0_i32, %c0_i32_0 : i32, i32
  }
  func.func @transform_3(%arg0: i32) -> (i32, i32) {
    %c0_i32 = arith.constant 0 : i32
    %c0_i32_0 = arith.constant 0 : i32
    %c0_i32_1 = arith.constant 0 : i32
    return %c0_i32, %c0_i32_0 : i32, i32
  }
  func.func @transform_4(%arg0: i32) -> (i32, i32) {
    %c0_i32 = arith.constant 0 : i32
    %c0_i32_0 = arith.constant 0 : i32
    %c0_i32_1 = arith.constant 0 : i32
    return %c0_i32, %c0_i32_0 : i32, i32
  }
  func.func @transform_5(%arg0: i32) -> (i32, i32) {
    %c0_i32 = arith.constant 0 : i32
    %c0_i32_0 = arith.constant 0 : i32
    %c0_i32_1 = arith.constant 0 : i32
    return %c0_i32, %c0_i32_0 : i32, i32
  }
  func.func @transform_6(%arg0: i32) -> (i32, i32) {
    %c0_i32 = arith.constant 0 : i32
    %c0_i32_0 = arith.constant 0 : i32
    return %arg0, %c0_i32 : i32, i32
  }
}

</mosaic_0001>

<llo_original>
// kernel: tpu_custom_call.1
$region0: #{tpu_custom_call.1}
  #allocation0 [shape = 'u32[]', space=smem, size = 0x4, offset = 0x4, fixed_abs, tag = 'smem constant byte address 0x4 - core index']
  #allocation1 [shape = 'u32[72,128]{1,0:T(1,128)}', space=vmem, size = 0x9000, scoped, tag = 'internal scratch']
  %s0 = inlined_call_operand.hbm [shape: bf16[2,8,128], index: 0, kind: input, shape index: {}]
  %s1 = inlined_call_operand.hbm [shape: bf16[128,128], index: 1, kind: input, shape index: {}]
  %s2 = inlined_call_operand.hbm [shape: bf16[128,256], index: 2, kind: input, shape index: {}]
  %s3 = inlined_call_operand.hbm [shape: bf16[128,128], index: 3, kind: input, shape index: {}]
  %s4 = inlined_call_operand.hbm [shape: f32[1,128], index: 4, kind: input, shape index: {}]
  %s5 = inlined_call_operand.vmem [shape: bf16[8,128], index: 5, kind: input, shape index: {}]
  %s6 = inlined_call_operand.hbm [shape: f32[2,128], index: 6, kind: output, shape index: {}]
  %s7 = sld [smem:[#allocation0]]
  $region54: #{tpu_custom_call.1} parent=0
    _
  %s9 = ssub.s32 1, %s7
  %s10 = scalar_select 0, %s9, %s7
  $region1: #{tpu_custom_call.1} parent=0
    #allocation2 [shape = 'u8[4096]{0}', space=vmem, size = 0x1000, scoped, tag = 'input window, operand 0, single buffered']
    #allocation3 [shape = 's32[1]{0}', space=sflag, size = 0x4, scoped, tag = 'scoped memory for tpu_custom_call.1']
    #allocation4 [shape = 's32[1]{0}', space=sflag, size = 0x4, scoped, tag = 'scoped memory for tpu_custom_call.1']
    #allocation5 [shape = 'u8[32768]{0}', space=vmem, size = 0x8000, scoped, tag = 'input window, operand 1, single buffered']
    #allocation6 [shape = 's32[1]{0}', space=sflag, size = 0x4, scoped, tag = 'scoped memory for tpu_custom_call.1']
    #allocation7 [shape = 'u8[65536]{0}', space=vmem, size = 0x10000, scoped, tag = 'input window, operand 2, single buffered']
    #allocation8 [shape = 'u8[32768]{0}', space=vmem, size = 0x8000, scoped, tag = 'input window, operand 3, single buffered']
    #allocation9 [shape = 's32[1]{0}', space=sflag, size = 0x4, scoped, tag = 'scoped memory for tpu_custom_call.1']
    #allocation10 [shape = 'u8[512]{0}', space=vmem, size = 0x400, scoped, tag = 'input window, operand 4, single buffered']
    #allocation11 [shape = 'u8[1024]{0}', space=vmem, size = 0x400, scoped, tag = 'output window, operand 0, single buffered']
    %11 = vsyncpa [#allocation3], 0
    %12 = vsyncpa [#allocation6], 0
    %13 = vsyncpa [#allocation9], 0
    %14 = vsyncpa [#allocation4], 0
    // Predicated region
    $region2: #{tpu_custom_call.1} parent=1 // pred_check
      _
    $region3: #{tpu_custom_call.1} parent=1 // pred_check_branch
      %16 = sbr.rel (0) target = $region5
    $region4: #{tpu_custom_call.1} parent=1 // pred_region
      %18 = vsyncadd [#allocation3], 0
      %s19 = sshll.u32 %s0, 4
      %s20 = int_to_ptr.hbm [resolvable:$true] %s19
      %s21 = sshll.u32 [#allocation2], 4
      %s22 = int_to_ptr.vmem [resolvable:$true] %s21
      %27 = dma.hbm_to_vmem [thread:$0]  %s20, 128, %s22, [#allocation3], 64, 64, 4
    $region5: #{tpu_custom_call.1} parent=1 // pred_fallthru
      _
    // Predicated region
    $region6: #{tpu_custom_call.1} parent=1 // pred_check
      _
    $region7: #{tpu_custom_call.1} parent=1 // pred_check_branch
      %29 = sbr.rel (0) target = $region9
    $region8: #{tpu_custom_call.1} parent=1 // pred_region
      %31 = vsyncadd [#allocation6], 0
      %s32 = sshll.u32 %s1, 4
      %s33 = int_to_ptr.hbm [resolvable:$true] %s32
      %s34 = sshll.u32 [#allocation5], 4
      %s35 = int_to_ptr.vmem [resolvable:$true] %s34
      %40 = dma.hbm_to_vmem [thread:$0]  %s33, 1024, %s35, [#allocation6], 64, 64, 4
    $region9: #{tpu_custom_call.1} parent=1 // pred_fallthru
      _
    // Predicated region
    $region10: #{tpu_custom_call.1} parent=1 // pred_check
      _
    $region11: #{tpu_custom_call.1} parent=1 // pred_check_branch
      %42 = sbr.rel (0) target = $region13
    $region12: #{tpu_custom_call.1} parent=1 // pred_region
      %44 = vsyncadd [#allocation6], 0
      %s45 = sshll.u32 %s2, 4
      %s46 = int_to_ptr.hbm [resolvable:$true] %s45
      %s47 = sshll.u32 [#allocation7], 4
      %s48 = int_to_ptr.vmem [resolvable:$true] %s47
      %53 = dma.hbm_to_vmem [thread:$0]  %s46, 2048, %s48, [#allocation6], 128, 128, 8
    $region13: #{tpu_custom_call.1} parent=1 // pred_fallthru
      _
    // Predicated region
    $region14: #{tpu_custom_call.1} parent=1 // pred_check
      _
    $region15: #{tpu_custom_call.1} parent=1 // pred_check_branch
      %55 = sbr.rel (0) target = $region17
    $region16: #{tpu_custom_call.1} parent=1 // pred_region
      %57 = vsyncadd [#allocation9], 0
      %s58 = sshll.u32 %s3, 4
      %s59 = int_to_ptr.hbm [resolvable:$true] %s58
      %s60 = sshll.u32 [#allocation8], 4
      %s61 = int_to_ptr.vmem [resolvable:$true] %s60
      %66 = dma.hbm_to_vmem [thread:$0]  %s59, 1024, %s61, [#allocation9], 64, 64, 4
    $region17: #{tpu_custom_call.1} parent=1 // pred_fallthru
      _
    // Predicated region
    $region18: #{tpu_custom_call.1} parent=1 // pred_check
      _
    $region19: #{tpu_custom_call.1} parent=1 // pred_check_branch
      %68 = sbr.rel (0) target = $region21
    $region20: #{tpu_custom_call.1} parent=1 // pred_region
      %70 = vsyncadd [#allocation9], 0
      %s72 = sshll.u32 %s4, 4
      %s73 = int_to_ptr.hbm [resolvable:$true] %s72
      %s74 = sshll.u32 [#allocation10], 4
      %s75 = int_to_ptr.vmem [resolvable:$true] %s74
      %77 = dma.hbm_to_vmem [thread:$0]  %s73, 16, %s75, [#allocation9]
    $region21: #{tpu_custom_call.1} parent=1 // pred_fallthru
      _
    // Predicated region
    $region22: #{tpu_custom_call.1} parent=1 // pred_check
      _
    $region23: #{tpu_custom_call.1} parent=1 // pred_check_branch
      %79 = sbr.rel (0) target = $region25
    $region24: #{tpu_custom_call.1} parent=1 // pred_region
      _
    $region25: #{tpu_custom_call.1} parent=1 // pred_fallthru
      _
    // Predicated region
    $region26: #{tpu_custom_call.1} parent=1 // pred_check
      _
    $region27: #{tpu_custom_call.1} parent=1 // pred_check_branch
      %81 = sbr.rel (0) target = $region29
    $region28: #{tpu_custom_call.1} parent=1 // pred_region
      %83 = dma.done [#allocation3], 128
    $region29: #{tpu_custom_call.1} parent=1 // pred_fallthru
      _
    // Predicated region
    $region30: #{tpu_custom_call.1} parent=1 // pred_check
      _
    $region31: #{tpu_custom_call.1} parent=1 // pred_check_branch
      %85 = sbr.rel (0) target = $region33
    $region32: #{tpu_custom_call.1} parent=1 // pred_region
      %87 = dma.done [#allocation6], 1024
    $region33: #{tpu_custom_call.1} parent=1 // pred_fallthru
      _
    // Predicated region
    $region34: #{tpu_custom_call.1} parent=1 // pred_check
      _
    $region35: #{tpu_custom_call.1} parent=1 // pred_check_branch
      %89 = sbr.rel (0) target = $region37
    $region36: #{tpu_custom_call.1} parent=1 // pred_region
      %91 = dma.done [#allocation6], 2048
    $region37: #{tpu_custom_call.1} parent=1 // pred_fallthru
      _
    // Predicated region
    $region38: #{tpu_custom_call.1} parent=1 // pred_check
      _
    $region39: #{tpu_custom_call.1} parent=1 // pred_check_branch
      %93 = sbr.rel (0) target = $region41
    $region40: #{tpu_custom_call.1} parent=1 // pred_region
      %95 = dma.done [#allocation9], 1024
    $region41: #{tpu_custom_call.1} parent=1 // pred_fallthru
      _
    // Predicated region
    $region42: #{tpu_custom_call.1} parent=1 // pred_check
      _
    $region43: #{tpu_custom_call.1} parent=1 // pred_check_branch
      %97 = sbr.rel (0) target = $region45
    $region44: #{tpu_custom_call.1} parent=1 // pred_region
      %99 = dma.done [#allocation9], 16
    $region45: #{tpu_custom_call.1} parent=1 // pred_fallthru
      _
    %v101 = vld [vmem:[#allocation5] sm:$0xf]
    %v102 = vld [vmem:[#allocation5 + $0x4] sm:$0xf]
    %v103 = vld [vmem:[#allocation5 + $0x8] sm:$0xf]
    %v104 = vld [vmem:[#allocation5 + $0xc] sm:$0xf]
    %v105 = vld [vmem:[#allocation5 + $0x10] sm:$0xf]
    %v106 = vld [vmem:[#allocation5 + $0x14] sm:$0xf]
    %v107 = vld [vmem:[#allocation5 + $0x18] sm:$0xf]
    %v108 = vld [vmem:[#allocation5 + $0x1c] sm:$0xf]
    %v109 = vld [vmem:[#allocation5 + $0x20] sm:$0xf]
    %v110 = vld [vmem:[#allocation5 + $0x24] sm:$0xf]
    %v111 = vld [vmem:[#allocation5 + $0x28] sm:$0xf]
    %v112 = vld [vmem:[#allocation5 + $0x2c] sm:$0xf]
    %v113 = vld [vmem:[#allocation5 + $0x30] sm:$0xf]
    %v114 = vld [vmem:[#allocation5 + $0x34] sm:$0xf]
    %v115 = vld [vmem:[#allocation5 + $0x38] sm:$0xf]
    %v116 = vld [vmem:[#allocation5 + $0x3c] sm:$0xf]
    %v117 = vld [vmem:[#allocation7] sm:$0xff]
    %v118 = vld [vmem:[#allocation7 + $0x8] sm:$0xff]
    %v119 = vld [vmem:[#allocation7 + $0x10] sm:$0xff]
    %v120 = vld [vmem:[#allocation7 + $0x18] sm:$0xff]
    %v121 = vld [vmem:[#allocation7 + $0x20] sm:$0xff]
    %v122 = vld [vmem:[#allocation7 + $0x28] sm:$0xff]
    %v123 = vld [vmem:[#allocation7 + $0x30] sm:$0xff]
    %v124 = vld [vmem:[#allocation7 + $0x38] sm:$0xff]
    %v125 = vld [vmem:[#allocation7 + $0x40] sm:$0xff]
    %v126 = vld [vmem:[#allocation7 + $0x48] sm:$0xff]
    %v127 = vld [vmem:[#allocation7 + $0x50] sm:$0xff]
    %v128 = vld [vmem:[#allocation7 + $0x58] sm:$0xff]
    %v129 = vld [vmem:[#allocation7 + $0x60] sm:$0xff]
    %v130 = vld [vmem:[#allocation7 + $0x68] sm:$0xff]
    %v131 = vld [vmem:[#allocation7 + $0x70] sm:$0xff]
    %v132 = vld [vmem:[#allocation7 + $0x78] sm:$0xff]
    %v133 = vld [vmem:[#allocation8] sm:$0xf]
    %v134 = vld [vmem:[#allocation8 + $0x4] sm:$0xf]
    %v135 = vld [vmem:[#allocation8 + $0x8] sm:$0xf]
    %v136 = vld [vmem:[#allocation8 + $0xc] sm:$0xf]
    %v137 = vld [vmem:[#allocation8 + $0x10] sm:$0xf]
    %v138 = vld [vmem:[#allocation8 + $0x14] sm:$0xf]
    %v139 = vld [vmem:[#allocation8 + $0x18] sm:$0xf]
    %v140 = vld [vmem:[#allocation8 + $0x1c] sm:$0xf]
    %v141 = vld [vmem:[#allocation8 + $0x20] sm:$0xf]
    %v142 = vld [vmem:[#allocation8 + $0x24] sm:$0xf]
    %v143 = vld [vmem:[#allocation8 + $0x28] sm:$0xf]
    %v144 = vld [vmem:[#allocation8 + $0x2c] sm:$0xf]
    %v145 = vld [vmem:[#allocation8 + $0x30] sm:$0xf]
    %v146 = vld [vmem:[#allocation8 + $0x34] sm:$0xf]
    %v147 = vld [vmem:[#allocation8 + $0x38] sm:$0xf]
    %v148 = vld [vmem:[#allocation8 + $0x3c] sm:$0xf]
    %v149 = vld [vmem:[#allocation10] sm:$0x1]
    %v150 = vld [vmem:[%s5] sm:$0xf]
    %v151 = vld [vmem:[#allocation2] sm:$0xf]
    %v152 = vld [vmem:[#allocation2 + $0x4] sm:$0xf]
    %v155 = vunpack.c.l.b16 %v151
    %v156 = vunpack.c.l.b16 %v152
    %v157 = vpack.c.b16 %v156, %v155
    %v175 = vunpack.c.l.b16 %v117
    %v176 = vunpack.c.h.b16 %v117
    %v177 = vunpack.c.l.b16 %v118
    %v178 = vunpack.c.h.b16 %v118
    %v179 = vunpack.c.l.b16 %v119
    %v180 = vunpack.c.h.b16 %v119
    %v181 = vunpack.c.l.b16 %v120
    %v182 = vunpack.c.h.b16 %v120
    %v183 = vunpack.c.l.b16 %v121
    %v184 = vunpack.c.h.b16 %v121
    %v185 = vunpack.c.l.b16 %v122
    %v186 = vunpack.c.h.b16 %v122
    %v187 = vunpack.c.l.b16 %v123
    %v188 = vunpack.c.h.b16 %v123
    %v189 = vunpack.c.l.b16 %v124
    %v190 = vunpack.c.h.b16 %v124
    %v191 = vunpack.c.l.b16 %v125
    %v192 = vunpack.c.h.b16 %v125
    %v193 = vunpack.c.l.b16 %v126
    %v194 = vunpack.c.h.b16 %v126
    %v195 = vunpack.c.l.b16 %v127
    %v196 = vunpack.c.h.b16 %v127
    %v197 = vunpack.c.l.b16 %v128
    %v198 = vunpack.c.h.b16 %v128
    %v199 = vunpack.c.l.b16 %v129
    %v200 = vunpack.c.h.b16 %v129
    %v201 = vunpack.c.l.b16 %v130
    %v202 = vunpack.c.h.b16 %v130
    %v203 = vunpack.c.l.b16 %v131
    %v204 = vunpack.c.h.b16 %v131
    %v205 = vunpack.c.l.b16 %v132
    %v206 = vunpack.c.h.b16 %v132
    %v207 = vpack.c.b16 %v177, %v175
    %v208 = vpack.c.b16 %v178, %v176
    %v209 = vpack.c.b16 %v181, %v179
    %v210 = vpack.c.b16 %v182, %v180
    %v211 = vpack.c.b16 %v185, %v183
    %v212 = vpack.c.b16 %v186, %v184
    %v213 = vpack.c.b16 %v189, %v187
    %v214 = vpack.c.b16 %v190, %v188
    %v215 = vpack.c.b16 %v193, %v191
    %v216 = vpack.c.b16 %v194, %v192
    %v217 = vpack.c.b16 %v197, %v195
    %v218 = vpack.c.b16 %v198, %v196
    %v219 = vpack.c.b16 %v201, %v199
    %v220 = vpack.c.b16 %v202, %v200
    %v221 = vpack.c.b16 %v205, %v203
    %v222 = vpack.c.b16 %v206, %v204
    %239 = vmatpush.bf16.msra.mxu0 %v221
    %240 = vmatpush.bf16.msra.mxu0 %v219
    %241 = vmatpush.bf16.msra.mxu0 %v217
    %242 = vmatpush.bf16.msra.mxu0 %v215
    %243 = vmatpush.bf16.msra.mxu0 %v213
    %244 = vmatpush.bf16.msra.mxu0 %v211
    %245 = vmatpush.bf16.msra.mxu0 %v209
    %246 = vmatpush.bf16.msra.mxu0 %v207
    %247 = vmatmul.bf16.gmra.mxu0 %v157
    %v248 = vpop.f32.mrf.mxu0
    %v249 = vadd.f32 0.0, %v248
    %v250 = vpop.f32.mrf.mxu0
    %v251 = vadd.f32 0.0, %v250
    %252 = vdwg.mxu0
    %253 = vmatpush.bf16.msra.mxu0 %v222
    %254 = vmatpush.bf16.msra.mxu0 %v220
    %255 = vmatpush.bf16.msra.mxu0 %v218
    %256 = vmatpush.bf16.msra.mxu0 %v216
    %257 = vmatpush.bf16.msra.mxu0 %v214
    %258 = vmatpush.bf16.msra.mxu0 %v212
    %259 = vmatpush.bf16.msra.mxu0 %v210
    %260 = vmatpush.bf16.msra.mxu0 %v208
    %261 = vmatmul.bf16.gmra.mxu0 %v157
    %v262 = vpop.f32.mrf.mxu0
    %v263 = vadd.f32 0.0, %v262
    %v264 = vpop.f32.mrf.mxu0
    %v265 = vadd.f32 0.0, %v264
    %266 = vdwg.mxu0
    %v267 = vpack.c.b16 %v155, %v155
    %v268 = vpack.c.b16 %v156, %v156
    %v269 = vunpack.c.l.b16 %v267
    %v270 = vunpack.c.l.b16 %v268
    %v271 = vrot.slane %v270, 7
    %vm272 = vcmask 1041409
    %v273 = vsel %vm272, %v271, %v269
    %v274 = vpack.c.b16 %v273, %v273
    %v292 = vunpack.c.l.b16 %v101
    %v293 = vunpack.c.l.b16 %v102
    %v294 = vunpack.c.l.b16 %v103
    %v295 = vunpack.c.l.b16 %v104
    %v296 = vunpack.c.l.b16 %v105
    %v297 = vunpack.c.l.b16 %v106
    %v298 = vunpack.c.l.b16 %v107
    %v299 = vunpack.c.l.b16 %v108
    %v300 = vunpack.c.l.b16 %v109
    %v301 = vunpack.c.l.b16 %v110
    %v302 = vunpack.c.l.b16 %v111
    %v303 = vunpack.c.l.b16 %v112
    %v304 = vunpack.c.l.b16 %v113
    %v305 = vunpack.c.l.b16 %v114
    %v306 = vunpack.c.l.b16 %v115
    %v307 = vunpack.c.l.b16 %v116
    %v308 = vpack.c.b16 %v293, %v292
    %v309 = vpack.c.b16 %v295, %v294
    %v310 = vpack.c.b16 %v297, %v296
    %v311 = vpack.c.b16 %v299, %v298
    %v312 = vpack.c.b16 %v301, %v300
    %v313 = vpack.c.b16 %v303, %v302
    %v314 = vpack.c.b16 %v305, %v304
    %v315 = vpack.c.b16 %v307, %v306
    %324 = vmatpush.bf16.msra.mxu0 %v315
    %325 = vmatpush.bf16.msra.mxu0 %v314
    %326 = vmatpush.bf16.msra.mxu0 %v313
    %327 = vmatpush.bf16.msra.mxu0 %v312
    %328 = vmatpush.bf16.msra.mxu0 %v311
    %329 = vmatpush.bf16.msra.mxu0 %v310
    %330 = vmatpush.bf16.msra.mxu0 %v309
    %331 = vmatpush.bf16.msra.mxu0 %v308
    %332 = vmatmul.bf16.gmra.mxu0 %v274
    %v333 = vpop.f32.mrf.mxu0
    %v334 = vadd.f32 0.0, %v333
    %v335 = vpop.f32.mrf.mxu0
    %336 = vdwg.mxu0
    %v338 = vrot.slane %v334, 1
    %v339 = vperm.slane %v334, 0
    %v340 = vperm.slane %v338, 0
    %v343 = vmul.f32 %v339, %v249
    %v344 = vmul.f32 %v340, %v251
    %v345 = vpack.c.bf16 %v344, %v343
    %346 = vmatpush.bf16.xpose.msra.mxu0 0
    %347 = vmatpush.bf16.xpose.msra.mxu0 0
    %348 = vmatpush.bf16.xpose.msra.mxu0 0
    %349 = vmatpush.bf16.xpose.msra.mxu0 0
    %350 = vmatpush.bf16.xpose.msra.mxu0 0
    %351 = vmatpush.bf16.xpose.msra.mxu0 0
    %352 = vmatpush.bf16.xpose.msra.mxu0 0
    %353 = vmatpush.bf16.xpose.msra.mxu0 %v150
    %354 = vmatmul.bf16.gmra.mxu0 %v345
    %v355 = vpop.f32.mrf.mxu0
    %v356 = vadd.f32 0.0, %v355
    %v357 = vpop.f32.mrf.mxu0
    %v358 = vadd.f32 0.0, %v357
    %359 = vdwg.mxu0
    %vm360 = vcmask 64512
    %v361 = vsel %vm360, %v356, -inf
    %v362 = vrot.slane %v361, 4
    %v363 = vmax.f32 %v361, %v362
    %v364 = vrot.slane %v363, 2
    %v365 = vmax.f32 %v363, %v364
    %v366 = vrot.slane %v365, 1
    %v367 = vmax.f32 %v365, %v366
    %v368 = vsel %vm360, %v358, -inf
    %v369 = vrot.slane %v368, 4
    %v370 = vmax.f32 %v368, %v369
    %v371 = vrot.slane %v370, 2
    %v372 = vmax.f32 %v370, %v371
    %v373 = vrot.slane %v372, 1
    %v374 = vmax.f32 %v372, %v373
    %v375 = vsub.f32 %v356, %v367
    %v376 = vsub.f32 %v358, %v374
    %v377 = vmul.f32 %v375, 1.442695
    %v378 = vpow.pop %v377
    %v379 = vmul.f32 %v376, 1.442695
    %v380 = vpow.pop %v379
    %v381 = vsel %vm360, %v378, 0.0
    %v382 = vrot.slane %v381, 4
    %v383 = vadd.f32 %v381, %v382
    %v384 = vrot.slane %v383, 2
    %v385 = vadd.f32 %v383, %v384
    %v386 = vrot.slane %v385, 1
    %v387 = vadd.f32 %v385, %v386
    %v388 = vsel %vm360, %v380, 0.0
    %v389 = vrot.slane %v388, 4
    %v390 = vadd.f32 %v388, %v389
    %v391 = vrot.slane %v390, 2
    %v392 = vadd.f32 %v390, %v391
    %v393 = vrot.slane %v392, 1
    %v394 = vadd.f32 %v392, %v393
    %v395 = vrcp.pop %v387
    %v396 = vrcp.pop %v394
    %v397 = vmul.f32 %v378, %v395
    %v398 = vmul.f32 %v380, %v396
    %v399 = vpack.c.bf16 %v398, %v397
    %v401 = vsel %vm360, %v399, 0
    %vm403 = vcmask 1043456
    %v405 = vsel %vm403, %v150, 0
    %407 = vmatpush.bf16.msra.mxu0 0
    %408 = vmatpush.bf16.msra.mxu0 0
    %409 = vmatpush.bf16.msra.mxu0 0
    %410 = vmatpush.bf16.msra.mxu0 0
    %411 = vmatpush.bf16.msra.mxu0 0
    %412 = vmatpush.bf16.msra.mxu0 0
    %413 = vmatpush.bf16.msra.mxu0 0
    %414 = vmatpush.bf16.msra.mxu0 %v405
    %415 = vmatmul.bf16.gmra.mxu0 %v401
    %v416 = vpop.f32.mrf.mxu0
    %v417 = vadd.f32 0.0, %v416
    %v418 = vpop.f32.mrf.mxu0
    %v419 = vadd.f32 0.0, %v418
    %420 = vdwg.mxu0
    %v421 = vmul.f32 %v417, %v263
    %v422 = vmul.f32 %v419, %v265
    %v423 = vrot.slane %v421, 4
    %v424 = vadd.f32 %v421, %v423
    %v425 = vrot.slane %v424, 2
    %v426 = vadd.f32 %v424, %v425
    %v427 = vrot.slane %v426, 1
    %v428 = vadd.f32 %v426, %v427
    %v429 = vrot.slane %v422, 4
    %v430 = vadd.f32 %v422, %v429
    %v431 = vrot.slane %v430, 2
    %v432 = vadd.f32 %v430, %v431
    %v433 = vrot.slane %v432, 1
    %v434 = vadd.f32 %v432, %v433
    %v435 = vpack.c.bf16 %v428, %v428
    %v436 = vpack.c.bf16 %v434, %v434
    %v438 = vperm.slane %v149, 0
    %v442 = vunpack.c.l.b16 %v435
    %v443 = vunpack.c.l.b16 %v436
    %v444 = vsel %vm272, %v443, %v442
    %v445 = vpack.c.b16 %v444, %v444
    %v463 = vunpack.c.l.b16 %v133
    %v464 = vunpack.c.l.b16 %v134
    %v465 = vunpack.c.l.b16 %v135
    %v466 = vunpack.c.l.b16 %v136
    %v467 = vunpack.c.l.b16 %v137
    %v468 = vunpack.c.l.b16 %v138
    %v469 = vunpack.c.l.b16 %v139
    %v470 = vunpack.c.l.b16 %v140
    %v471 = vunpack.c.l.b16 %v141
    %v472 = vunpack.c.l.b16 %v142
    %v473 = vunpack.c.l.b16 %v143
    %v474 = vunpack.c.l.b16 %v144
    %v475 = vunpack.c.l.b16 %v145
    %v476 = vunpack.c.l.b16 %v146
    %v477 = vunpack.c.l.b16 %v147
    %v478 = vunpack.c.l.b16 %v148
    %v479 = vpack.c.b16 %v464, %v463
    %v480 = vpack.c.b16 %v466, %v465
    %v481 = vpack.c.b16 %v468, %v467
    %v482 = vpack.c.b16 %v470, %v469
    %v483 = vpack.c.b16 %v472, %v471
    %v484 = vpack.c.b16 %v474, %v473
    %v485 = vpack.c.b16 %v476, %v475
    %v486 = vpack.c.b16 %v478, %v477
    %495 = vmatpush.bf16.msra.mxu0 %v486
    %496 = vmatpush.bf16.msra.mxu0 %v485
    %497 = vmatpush.bf16.msra.mxu0 %v484
    %498 = vmatpush.bf16.msra.mxu0 %v483
    %499 = vmatpush.bf16.msra.mxu0 %v482
    %500 = vmatpush.bf16.msra.mxu0 %v481
    %501 = vmatpush.bf16.msra.mxu0 %v480
    %502 = vmatpush.bf16.msra.mxu0 %v479
    %503 = vmatmul.bf16.gmra.mxu0 %v445
    %v504 = vpop.f32.mrf.mxu0
    %v505 = vadd.f32 %v438, %v504
    %v506 = vpop.f32.mrf.mxu0
    %507 = vdwg.mxu0
    %508 = vst [vmem:[#allocation11] sm:$0x3] %v505
    // Predicated region
    $region46: #{tpu_custom_call.1} parent=1 // pred_check
      _
    $region47: #{tpu_custom_call.1} parent=1 // pred_check_branch
      %510 = sbr.rel (0) target = $region49
    $region48: #{tpu_custom_call.1} parent=1 // pred_region
      %512 = vsyncadd [#allocation4], 0
      %s514 = sshll.u32 [#allocation11], 4
      %s515 = int_to_ptr.vmem [resolvable:$true] %s514
      %s516 = sshll.u32 %s6, 4
      %s517 = int_to_ptr.hbm [resolvable:$true] %s516
      %519 = dma.vmem_to_hbm [thread:$0]  %s515, 32, %s517, [#allocation4]
    $region49: #{tpu_custom_call.1} parent=1 // pred_fallthru
      _
    // Predicated region
    $region50: #{tpu_custom_call.1} parent=1 // pred_check
      _
    $region51: #{tpu_custom_call.1} parent=1 // pred_check_branch
      %521 = sbr.rel (0) target = $region53
    $region52: #{tpu_custom_call.1} parent=1 // pred_region
      %523 = dma.done [#allocation4], 32
    $region53: #{tpu_custom_call.1} parent=1 // pred_fallthru
      _
    %524 = vsyncpa [#allocation3], 1
    %525 = vsyncpa [#allocation6], 1
    %526 = vsyncpa [#allocation9], 1
    %527 = vsyncpa [#allocation4], 1

</llo_original>
